<compile_context>
chip_gen: v5e
topology: v5e:2x2
jax: 0.10.0
libtpu: 0.0.40
codegen_flags: <defaults>
</compile_context>

<pallas_src>
import math

import jax
import jax.numpy as jnp
from jax.experimental import pallas as pl
from jax.experimental.pallas import tpu as pltpu

HIDDEN = 256
N_ACTIONS = 16
N_OUT_PAD = 128           # lane-dense padded output width (unmasked stores)
MAX_BATCH_TILE = 1024     # large TB amortizes per-grid-step overhead
MIN_SPLIT_BATCH = 256     # only force >=2 grid steps when each half keeps M>=128


def _round_up(x, m):
    return ((x + m - 1) // m) * m


def dqn_kernel(x_ref, w1_ref, b1_ref, w2_ref, b2_ref, w3_ref, b3_ref,
               w4_ref, b4_ref, o_ref):
    # layer1 + ReLU: bf16 matmul inputs, f32 accumulate / bias-add / ReLU.
    # (astype is a no-op if x already arrives in bf16.)
    h = jnp.dot(x_ref[...].astype(jnp.bfloat16), w1_ref[...],
                preferred_element_type=jnp.float32)
    h = jnp.maximum(h + b1_ref[...], 0.0).astype(jnp.bfloat16)
    # layer2 + ReLU
    h = jnp.dot(h, w2_ref[...], preferred_element_type=jnp.float32)
    h = jnp.maximum(h + b2_ref[...], 0.0).astype(jnp.bfloat16)
    # layer3 + ReLU
    h = jnp.dot(h, w3_ref[...], preferred_element_type=jnp.float32)
    h = jnp.maximum(h + b3_ref[...], 0.0).astype(jnp.bfloat16)
    # layer4 (no activation), padded to 128 output lanes, stored in bf16.
    out = jnp.dot(h, w4_ref[...], preferred_element_type=jnp.float32)
    o_ref[...] = (out + b4_ref[...]).astype(o_ref.dtype)


@jax.jit
def dqn_forward(x, params):
    """Fused DQN forward. Returns bf16 Q-values of shape [batch, N_ACTIONS]."""
    (w1, b1), (w2, b2), (w3, b3), (w4, b4) = params
    batch, n_obs = x.shape
    n_out_pad = w4.shape[1]

    # ---- batch tiling ----------------------------------------------------
    rb = _round_up(batch, 8)                 # sublane-aligned batch
    tb = min(MAX_BATCH_TILE, rb)
    # Guarantee >= 2 grid steps for medium/large batches so the "parallel"
    # batch axis can shard across both TensorCores on v7x. Split keeps TB a
    # multiple of 128 (full MXU M-tiles, per v5e guidance).
    if tb == rb and tb >= MIN_SPLIT_BATCH:
        tb = _round_up(tb // 2, 128)
    pad_batch = _round_up(batch, tb)
    if pad_batch != batch:
        # NOTE: padded rows produce garbage through ReLU(0*W + b); they are
        # sliced off below — never remove the [:batch] slice.
        x = jnp.pad(x, ((0, pad_batch - batch), (0, 0)))
    grid = (pad_batch // tb,)

    # Weights/biases: full-array blocks, index_map pinned to (0, 0) so they
    # remain VMEM-resident across all batch tiles.
    def resident(shape):
        return pl.BlockSpec(shape, lambda i: (0, 0))

    in_specs = [
        pl.BlockSpec((tb, n_obs), lambda i: (i, 0)),          # x (streamed)
        resident(w1.shape), resident(b1.shape),
        resident(w2.shape), resident(b2.shape),
        resident(w3.shape), resident(b3.shape),
        resident(w4.shape), resident(b4.shape),
    ]
    out_spec = pl.BlockSpec((tb, n_out_pad), lambda i: (i, 0))

    flops = 2 * pad_batch * (n_obs * HIDDEN + 2 * HIDDEN * HIDDEN
                             + HIDDEN * n_out_pad)
    bytes_accessed = (
        sum(int(a.size) * a.dtype.itemsize
            for a in (w1, b1, w2, b2, w3, b3, w4, b4))
        + pad_batch * n_obs * x.dtype.itemsize      # x stream
        + pad_batch * n_out_pad * 2                 # bf16 output stream
    )

    out = pl.pallas_call(
        dqn_kernel,
        out_shape=jax.ShapeDtypeStruct((pad_batch, n_out_pad), jnp.bfloat16),
        grid=grid,
        in_specs=in_specs,
        out_specs=out_spec,
        compiler_params=pltpu.CompilerParams(
            dimension_semantics=("parallel",)),
        cost_estimate=pl.CostEstimate(
            flops=flops, transcendentals=0, bytes_accessed=bytes_accessed),
    )(x, w1, b1, w2, b2, w3, b3, w4, b4)

    # Drop batch padding and the zero-padded action columns.
    return out[:batch, :N_ACTIONS]


def init_linear(key, fan_in, fan_out, pad_out=None):
    # PyTorch nn.Linear default init: U(-1/sqrt(fan_in), 1/sqrt(fan_in)),
    # stored as [in, out] (transposed relative to torch's [out, in]).
    kw, kb = jax.random.split(key)
    bound = 1.0 / math.sqrt(fan_in)
    w = jax.random.uniform(kw, (fan_in, fan_out), jnp.float32, -bound, bound)
    b = jax.random.uniform(kb, (1, fan_out), jnp.float32, -bound, bound)
    if pad_out is not None and pad_out > fan_out:
        w = jnp.pad(w, ((0, 0), (0, pad_out - fan_out)))
        b = jnp.pad(b, ((0, 0), (0, pad_out - fan_out)))
    # Weights in bf16 (MXU inputs), biases in f32 (added to f32 accumulator).
    return w.astype(jnp.bfloat16), b


def init_dqn_params(key, n_observations, n_actions):
    k1, k2, k3, k4 = jax.random.split(key, 4)
    return (
        init_linear(k1, n_observations, HIDDEN),
        init_linear(k2, HIDDEN, HIDDEN),
        init_linear(k3, HIDDEN, HIDDEN),
        init_linear(k4, HIDDEN, n_actions, pad_out=N_OUT_PAD),
    )


def dqn_reference(x, params, n_actions):
    # Mirrors the kernel numerics: bf16 matmul inputs, f32 accumulation.
    (w1, b1), (w2, b2), (w3, b3), (w4, b4) = params

    def lin(h, w, b):
        return jnp.dot(h.astype(jnp.bfloat16), w,
                       preferred_element_type=jnp.float32) + b

    h = jnp.maximum(lin(x, w1, b1), 0.0)
    h = jnp.maximum(lin(h, w2, b2), 0.0)
    h = jnp.maximum(lin(h, w3, b3), 0.0)
    return lin(h, w4, b4)[:, :n_actions]


if __name__ == "__main__":
    key = jax.random.PRNGKey(0)
    k_params, k_x = jax.random.split(key)

    batch = 8
    n_observations = 32

    params = init_dqn_params(k_params, n_observations, N_ACTIONS)
    x = jax.random.normal(k_x, (batch, n_observations), jnp.float32)

    out = dqn_forward(x, params)
    out = jax.block_until_ready(out)

    # Reference in f32, rounded to bf16 like the kernel's output store.
    ref = dqn_reference(x, params, N_ACTIONS).astype(jnp.bfloat16)
    assert out.shape == (batch, N_ACTIONS)
    assert out.dtype == jnp.bfloat16
    assert jnp.allclose(out.astype(jnp.float32), ref.astype(jnp.float32),
                        atol=2e-2, rtol=2e-2)

    # Also exercise a larger batch that triggers the >=2-step grid split
    # (v7x dual-TensorCore path) and batch padding.
    batch_big = 300
    x_big = jax.random.normal(jax.random.PRNGKey(1),
                              (batch_big, n_observations), jnp.float32)
    out_big = jax.block_until_ready(dqn_forward(x_big, params))
    ref_big = dqn_reference(x_big, params, N_ACTIONS).astype(jnp.bfloat16)
    assert out_big.shape == (batch_big, N_ACTIONS)
    assert jnp.allclose(out_big.astype(jnp.float32),
                        ref_big.astype(jnp.float32), atol=2e-2, rtol=2e-2)

    print("KERNEL_OK")
</pallas_src>

<mosaic_0001>
module attributes {stable_mosaic.version = 11 : i64} {
  func.func @dqn_kernel(%arg0: i32, %arg1: memref<8x32xf32, #tpu.memory_space<vmem>>, %arg2: memref<32x256xbf16, #tpu.memory_space<vmem>>, %arg3: memref<1x256xf32, #tpu.memory_space<vmem>>, %arg4: memref<256x256xbf16, #tpu.memory_space<vmem>>, %arg5: memref<1x256xf32, #tpu.memory_space<vmem>>, %arg6: memref<256x256xbf16, #tpu.memory_space<vmem>>, %arg7: memref<1x256xf32, #tpu.memory_space<vmem>>, %arg8: memref<256x128xbf16, #tpu.memory_space<vmem>>, %arg9: memref<1x128xf32, #tpu.memory_space<vmem>>, %arg10: memref<8x128xbf16, #tpu.memory_space<vmem>>) attributes {dimension_semantics = [#tpu.dimension_semantics<parallel>], iteration_bounds = array<i64: 1>, scalar_prefetch = 0 : i64, scratch_operands = 0 : i64, tpu.core_type = #tpu.core_type<tc>, window_params = [{transform_indices = @transform_0, window_bounds = array<i64: 8, 32>}, {pipeline_mode = #tpu.pipeline_mode<synchronous>, transform_indices = @transform_1, window_bounds = array<i64: 32, 256>}, {pipeline_mode = #tpu.pipeline_mode<synchronous>, transform_indices = @transform_2, window_bounds = array<i64: 1, 256>}, {pipeline_mode = #tpu.pipeline_mode<synchronous>, transform_indices = @transform_3, window_bounds = array<i64: 256, 256>}, {pipeline_mode = #tpu.pipeline_mode<synchronous>, transform_indices = @transform_4, window_bounds = array<i64: 1, 256>}, {pipeline_mode = #tpu.pipeline_mode<synchronous>, transform_indices = @transform_5, window_bounds = array<i64: 256, 256>}, {pipeline_mode = #tpu.pipeline_mode<synchronous>, transform_indices = @transform_6, window_bounds = array<i64: 1, 256>}, {pipeline_mode = #tpu.pipeline_mode<synchronous>, transform_indices = @transform_7, window_bounds = array<i64: 256, 128>}, {pipeline_mode = #tpu.pipeline_mode<synchronous>, transform_indices = @transform_8, window_bounds = array<i64: 1, 128>}, {transform_indices = @transform_9, window_bounds = array<i64: 8, 128>}]} {
    %c0 = arith.constant 0 : index
    %c0_0 = arith.constant 0 : index
    %0 = vector.load %arg1[%c0, %c0_0] : memref<8x32xf32, #tpu.memory_space<vmem>>, vector<8x32xf32>
    %1 = arith.truncf %0 : vector<8x32xf32> to vector<8x32xbf16>
    %c0_1 = arith.constant 0 : index
    %c0_2 = arith.constant 0 : index
    %2 = vector.load %arg2[%c0_1, %c0_2] : memref<32x256xbf16, #tpu.memory_space<vmem>>, vector<32x256xbf16>
    %cst = arith.constant dense<0.000000e+00> : vector<8x256xf32>
    %3 = tpu.matmul %1, %2, %cst {dimension_numbers = #tpu.dot_dimension_numbers<[1], [0], [0], [1], [0, 0, 1, 1], [], []>} : vector<8x32xbf16>, vector<32x256xbf16>, vector<8x256xf32> -> vector<8x256xf32>
    %c0_3 = arith.constant 0 : index
    %c0_4 = arith.constant 0 : index
    %4 = vector.load %arg3[%c0_3, %c0_4] : memref<1x256xf32, #tpu.memory_space<vmem>>, vector<1x256xf32>
    %5 = vector.broadcast %4 : vector<1x256xf32> to vector<8x256xf32>
    %6 = arith.addf %3, %5 : vector<8x256xf32>
    %cst_5 = arith.constant 0.000000e+00 : f32
    %7 = vector.broadcast %cst_5 : f32 to vector<8x256xf32>
    %8 = arith.maximumf %6, %7 : vector<8x256xf32>
    %9 = arith.truncf %8 : vector<8x256xf32> to vector<8x256xbf16>
    %c0_6 = arith.constant 0 : index
    %c0_7 = arith.constant 0 : index
    %10 = vector.load %arg4[%c0_6, %c0_7] : memref<256x256xbf16, #tpu.memory_space<vmem>>, vector<256x256xbf16>
    %cst_8 = arith.constant dense<0.000000e+00> : vector<8x256xf32>
    %11 = tpu.matmul %9, %10, %cst_8 {dimension_numbers = #tpu.dot_dimension_numbers<[1], [0], [0], [1], [0, 0, 1, 1], [], []>} : vector<8x256xbf16>, vector<256x256xbf16>, vector<8x256xf32> -> vector<8x256xf32>
    %c0_9 = arith.constant 0 : index
    %c0_10 = arith.constant 0 : index
    %12 = vector.load %arg5[%c0_9, %c0_10] : memref<1x256xf32, #tpu.memory_space<vmem>>, vector<1x256xf32>
    %13 = vector.broadcast %12 : vector<1x256xf32> to vector<8x256xf32>
    %14 = arith.addf %11, %13 : vector<8x256xf32>
    %cst_11 = arith.constant 0.000000e+00 : f32
    %15 = vector.broadcast %cst_11 : f32 to vector<8x256xf32>
    %16 = arith.maximumf %14, %15 : vector<8x256xf32>
    %17 = arith.truncf %16 : vector<8x256xf32> to vector<8x256xbf16>
    %c0_12 = arith.constant 0 : index
    %c0_13 = arith.constant 0 : index
    %18 = vector.load %arg6[%c0_12, %c0_13] : memref<256x256xbf16, #tpu.memory_space<vmem>>, vector<256x256xbf16>
    %cst_14 = arith.constant dense<0.000000e+00> : vector<8x256xf32>
    %19 = tpu.matmul %17, %18, %cst_14 {dimension_numbers = #tpu.dot_dimension_numbers<[1], [0], [0], [1], [0, 0, 1, 1], [], []>} : vector<8x256xbf16>, vector<256x256xbf16>, vector<8x256xf32> -> vector<8x256xf32>
    %c0_15 = arith.constant 0 : index
    %c0_16 = arith.constant 0 : index
    %20 = vector.load %arg7[%c0_15, %c0_16] : memref<1x256xf32, #tpu.memory_space<vmem>>, vector<1x256xf32>
    %21 = vector.broadcast %20 : vector<1x256xf32> to vector<8x256xf32>
    %22 = arith.addf %19, %21 : vector<8x256xf32>
    %cst_17 = arith.constant 0.000000e+00 : f32
    %23 = vector.broadcast %cst_17 : f32 to vector<8x256xf32>
    %24 = arith.maximumf %22, %23 : vector<8x256xf32>
    %25 = arith.truncf %24 : vector<8x256xf32> to vector<8x256xbf16>
    %c0_18 = arith.constant 0 : index
    %c0_19 = arith.constant 0 : index
    %26 = vector.load %arg8[%c0_18, %c0_19] : memref<256x128xbf16, #tpu.memory_space<vmem>>, vector<256x128xbf16>
    %cst_20 = arith.constant dense<0.000000e+00> : vector<8x128xf32>
    %27 = tpu.matmul %25, %26, %cst_20 {dimension_numbers = #tpu.dot_dimension_numbers<[1], [0], [0], [1], [0, 0, 1, 1], [], []>} : vector<8x256xbf16>, vector<256x128xbf16>, vector<8x128xf32> -> vector<8x128xf32>
    %c0_21 = arith.constant 0 : index
    %c0_22 = arith.constant 0 : index
    %28 = vector.load %arg9[%c0_21, %c0_22] : memref<1x128xf32, #tpu.memory_space<vmem>>, vector<1x128xf32>
    %29 = vector.broadcast %28 : vector<1x128xf32> to vector<8x128xf32>
    %30 = arith.addf %27, %29 : vector<8x128xf32>
    %31 = arith.truncf %30 : vector<8x128xf32> to vector<8x128xbf16>
    %c0_23 = arith.constant 0 : index
    %c0_24 = arith.constant 0 : index
    %32 = vector.load %arg10[%c0_23, %c0_24] : memref<8x128xbf16, #tpu.memory_space<vmem>>, vector<8x128xbf16>
    tpu.vector_store %arg10[%c0_23, %c0_24], %31 {strides = array<i32>} : memref<8x128xbf16, #tpu.memory_space<vmem>>, vector<8x128xbf16>,
    return
  }
  func.func @transform_0(%arg0: i32) -> (i32, i32) {
    %c0_i32 = arith.constant 0 : i32
    %c0_i32_0 = arith.constant 0 : i32
    return %arg0, %c0_i32 : i32, i32
  }
  func.func @transform_1(%arg0: i32) -> (i32, i32) {
    %c0_i32 = arith.constant 0 : i32
    %c0_i32_0 = arith.constant 0 : i32
    %c0_i32_1 = arith.constant 0 : i32
    return %c0_i32, %c0_i32_0 : i32, i32
  }
  func.func @transform_2(%arg0: i32) -> (i32, i32) {
    %c0_i32 = arith.constant 0 : i32
    %c0_i32_0 = arith.constant 0 : i32
    %c0_i32_1 = arith.constant 0 : i32
    return %c0_i32, %c0_i32_0 : i32, i32
  }
  func.func @transform_3(%arg0: i32) -> (i32, i32) {
    %c0_i32 = arith.constant 0 : i32
    %c0_i32_0 = arith.constant 0 : i32
    %c0_i32_1 = arith.constant 0 : i32
    return %c0_i32, %c0_i32_0 : i32, i32
  }
  func.func @transform_4(%arg0: i32) -> (i32, i32) {
    %c0_i32 = arith.constant 0 : i32
    %c0_i32_0 = arith.constant 0 : i32
    %c0_i32_1 = arith.constant 0 : i32
    return %c0_i32, %c0_i32_0 : i32, i32
  }
  func.func @transform_5(%arg0: i32) -> (i32, i32) {
    %c0_i32 = arith.constant 0 : i32
    %c0_i32_0 = arith.constant 0 : i32
    %c0_i32_1 = arith.constant 0 : i32
    return %c0_i32, %c0_i32_0 : i32, i32
  }
  func.func @transform_6(%arg0: i32) -> (i32, i32) {
    %c0_i32 = arith.constant 0 : i32
    %c0_i32_0 = arith.constant 0 : i32
    %c0_i32_1 = arith.constant 0 : i32
    return %c0_i32, %c0_i32_0 : i32, i32
  }
  func.func @transform_7(%arg0: i32) -> (i32, i32) {
    %c0_i32 = arith.constant 0 : i32
    %c0_i32_0 = arith.constant 0 : i32
    %c0_i32_1 = arith.constant 0 : i32
    return %c0_i32, %c0_i32_0 : i32, i32
  }
  func.func @transform_8(%arg0: i32) -> (i32, i32) {
    %c0_i32 = arith.constant 0 : i32
    %c0_i32_0 = arith.constant 0 : i32
    %c0_i32_1 = arith.constant 0 : i32
    return %c0_i32, %c0_i32_0 : i32, i32
  }
  func.func @transform_9(%arg0: i32) -> (i32, i32) {
    %c0_i32 = arith.constant 0 : i32
    %c0_i32_0 = arith.constant 0 : i32
    return %arg0, %c0_i32 : i32, i32
  }
}

</mosaic_0001>

<llo_original>
// kernel: dqn_forward.1
$region0: #{dqn_forward.1}
  #allocation0 [shape = 'u32[]', space=smem, size = 0x4, offset = 0x4, fixed_abs, tag = 'smem constant byte address 0x4 - core index']
  #allocation1 [shape = 'u32[72,128]{1,0:T(1,128)}', space=vmem, size = 0x9000, scoped, tag = 'internal scratch']
  %s0 = inlined_call_operand.hbm [shape: f32[8,32], index: 0, kind: input, shape index: {}]
  %s1 = inlined_call_operand.hbm [shape: bf16[32,256], index: 1, kind: input, shape index: {}]
  %s2 = inlined_call_operand.hbm [shape: f32[1,256], index: 2, kind: input, shape index: {}]
  %s3 = inlined_call_operand.hbm [shape: bf16[256,256], index: 3, kind: input, shape index: {}]
  %s4 = inlined_call_operand.vmem [shape: f32[1,256], index: 4, kind: input, shape index: {}]
  %s5 = inlined_call_operand.hbm [shape: bf16[256,256], index: 5, kind: input, shape index: {}]
  %s6 = inlined_call_operand.vmem [shape: f32[1,256], index: 6, kind: input, shape index: {}]
  %s7 = inlined_call_operand.hbm [shape: bf16[256,128], index: 7, kind: input, shape index: {}]
  %s8 = inlined_call_operand.vmem [shape: f32[1,128], index: 8, kind: input, shape index: {}]
  %s9 = inlined_call_operand.hbm [shape: bf16[8,128], index: 9, kind: output, shape index: {}]
  %s10 = sld [smem:[#allocation0]]
  $region70: #{dqn_forward.1} parent=0
    _
  %s12 = ssub.s32 1, %s10
  %s13 = scalar_select 0, %s12, %s10
  $region1: #{dqn_forward.1} parent=0
    #allocation2 [shape = 'u8[4096]{0}', space=vmem, size = 0x1000, scoped, tag = 'input window, operand 0, single buffered']
    #allocation3 [shape = 's32[1]{0}', space=sflag, size = 0x4, scoped, tag = 'scoped memory for dqn_forward.1']
    #allocation4 [shape = 's32[1]{0}', space=sflag, size = 0x4, scoped, tag = 'scoped memory for dqn_forward.1']
    #allocation5 [shape = 'u8[16384]{0}', space=vmem, size = 0x4000, scoped, tag = 'input window, operand 1, single buffered']
    #allocation6 [shape = 's32[1]{0}', space=sflag, size = 0x4, scoped, tag = 'scoped memory for dqn_forward.1']
    #allocation7 [shape = 'u8[1024]{0}', space=vmem, size = 0x400, scoped, tag = 'input window, operand 2, single buffered']
    #allocation8 [shape = 'u8[131072]{0}', space=vmem, size = 0x20000, scoped, tag = 'input window, operand 3, single buffered']
    #allocation9 [shape = 's32[1]{0}', space=sflag, size = 0x4, scoped, tag = 'scoped memory for dqn_forward.1']
    #allocation10 [shape = 'u8[131072]{0}', space=vmem, size = 0x20000, scoped, tag = 'input window, operand 5, single buffered']
    #allocation11 [shape = 'u8[65536]{0}', space=vmem, size = 0x10000, scoped, tag = 'input window, operand 7, single buffered']
    #allocation12 [shape = 's32[1]{0}', space=sflag, size = 0x4, scoped, tag = 'scoped memory for dqn_forward.1']
    #allocation13 [shape = 'u8[2048]{0}', space=vmem, size = 0x800, scoped, tag = 'output window, operand 0, single buffered']
    %14 = vsyncpa [#allocation3], 0
    %15 = vsyncpa [#allocation6], 0
    %16 = vsyncpa [#allocation9], 0
    %17 = vsyncpa [#allocation12], 0
    %18 = vsyncpa [#allocation4], 0
    // Predicated region
    $region2: #{dqn_forward.1} parent=1 // pred_check
      _
    $region3: #{dqn_forward.1} parent=1 // pred_check_branch
      %20 = sbr.rel (0) target = $region5
    $region4: #{dqn_forward.1} parent=1 // pred_region
      %22 = vsyncadd [#allocation3], 0
      %s24 = sshll.u32 %s0, 4
      %s25 = int_to_ptr.hbm [resolvable:$true] %s24
      %s26 = sshll.u32 [#allocation2], 4
      %s27 = int_to_ptr.vmem [resolvable:$true] %s26
      %29 = dma.hbm_to_vmem [thread:$0]  %s25, 128, %s27, [#allocation3]
    $region5: #{dqn_forward.1} parent=1 // pred_fallthru
      _
    // Predicated region
    $region6: #{dqn_forward.1} parent=1 // pred_check
      _
    $region7: #{dqn_forward.1} parent=1 // pred_check_branch
      %31 = sbr.rel (0) target = $region9
    $region8: #{dqn_forward.1} parent=1 // pred_region
      %33 = vsyncadd [#allocation6], 0
      %s34 = sshll.u32 %s1, 4
      %s35 = int_to_ptr.hbm [resolvable:$true] %s34
      %s36 = sshll.u32 [#allocation5], 4
      %s37 = int_to_ptr.vmem [resolvable:$true] %s36
      %42 = dma.hbm_to_vmem [thread:$0]  %s35, 512, %s37, [#allocation6], 128, 128, 8
    $region9: #{dqn_forward.1} parent=1 // pred_fallthru
      _
    // Predicated region
    $region10: #{dqn_forward.1} parent=1 // pred_check
      _
    $region11: #{dqn_forward.1} parent=1 // pred_check_branch
      %44 = sbr.rel (0) target = $region13
    $region12: #{dqn_forward.1} parent=1 // pred_region
      %46 = vsyncadd [#allocation6], 0
      %s48 = sshll.u32 %s2, 4
      %s49 = int_to_ptr.hbm [resolvable:$true] %s48
      %s50 = sshll.u32 [#allocation7], 4
      %s51 = int_to_ptr.vmem [resolvable:$true] %s50
      %53 = dma.hbm_to_vmem [thread:$0]  %s49, 32, %s51, [#allocation6]
    $region13: #{dqn_forward.1} parent=1 // pred_fallthru
      _
    // Predicated region
    $region14: #{dqn_forward.1} parent=1 // pred_check
      _
    $region15: #{dqn_forward.1} parent=1 // pred_check_branch
      %55 = sbr.rel (0) target = $region17
    $region16: #{dqn_forward.1} parent=1 // pred_region
      %57 = vsyncadd [#allocation9], 0
      %s58 = sshll.u32 %s3, 4
      %s59 = int_to_ptr.hbm [resolvable:$true] %s58
      %s60 = sshll.u32 [#allocation8], 4
      %s61 = int_to_ptr.vmem [resolvable:$true] %s60
      %66 = dma.hbm_to_vmem [thread:$0]  %s59, 4096, %s61, [#allocation9], 128, 128, 8
    $region17: #{dqn_forward.1} parent=1 // pred_fallthru
      _
    // Predicated region
    $region18: #{dqn_forward.1} parent=1 // pred_check
      _
    $region19: #{dqn_forward.1} parent=1 // pred_check_branch
      %68 = sbr.rel (0) target = $region21
    $region20: #{dqn_forward.1} parent=1 // pred_region
      _
    $region21: #{dqn_forward.1} parent=1 // pred_fallthru
      _
    // Predicated region
    $region22: #{dqn_forward.1} parent=1 // pred_check
      _
    $region23: #{dqn_forward.1} parent=1 // pred_check_branch
      %70 = sbr.rel (0) target = $region25
    $region24: #{dqn_forward.1} parent=1 // pred_region
      %72 = vsyncadd [#allocation9], 0
      %s73 = sshll.u32 %s5, 4
      %s74 = int_to_ptr.hbm [resolvable:$true] %s73
      %s75 = sshll.u32 [#allocation10], 4
      %s76 = int_to_ptr.vmem [resolvable:$true] %s75
      %81 = dma.hbm_to_vmem [thread:$0]  %s74, 4096, %s76, [#allocation9], 128, 128, 8
    $region25: #{dqn_forward.1} parent=1 // pred_fallthru
      _
    // Predicated region
    $region26: #{dqn_forward.1} parent=1 // pred_check
      _
    $region27: #{dqn_forward.1} parent=1 // pred_check_branch
      %83 = sbr.rel (0) target = $region29
    $region28: #{dqn_forward.1} parent=1 // pred_region
      _
    $region29: #{dqn_forward.1} parent=1 // pred_fallthru
      _
    // Predicated region
    $region30: #{dqn_forward.1} parent=1 // pred_check
      _
    $region31: #{dqn_forward.1} parent=1 // pred_check_branch
      %85 = sbr.rel (0) target = $region33
    $region32: #{dqn_forward.1} parent=1 // pred_region
      %87 = vsyncadd [#allocation12], 0
      %s88 = sshll.u32 %s7, 4
      %s89 = int_to_ptr.hbm [resolvable:$true] %s88
      %s90 = sshll.u32 [#allocation11], 4
      %s91 = int_to_ptr.vmem [resolvable:$true] %s90
      %96 = dma.hbm_to_vmem [thread:$0]  %s89, 2048, %s91, [#allocation12], 64, 64, 4
    $region33: #{dqn_forward.1} parent=1 // pred_fallthru
      _
    // Predicated region
    $region34: #{dqn_forward.1} parent=1 // pred_check
      _
    $region35: #{dqn_forward.1} parent=1 // pred_check_branch
      %98 = sbr.rel (0) target = $region37
    $region36: #{dqn_forward.1} parent=1 // pred_region
      _
    $region37: #{dqn_forward.1} parent=1 // pred_fallthru
      _
    // Predicated region
    $region38: #{dqn_forward.1} parent=1 // pred_check
      _
    $region39: #{dqn_forward.1} parent=1 // pred_check_branch
      %100 = sbr.rel (0) target = $region41
    $region40: #{dqn_forward.1} parent=1 // pred_region
      %102 = dma.done [#allocation3], 128
    $region41: #{dqn_forward.1} parent=1 // pred_fallthru
      _
    // Predicated region
    $region42: #{dqn_forward.1} parent=1 // pred_check
      _
    $region43: #{dqn_forward.1} parent=1 // pred_check_branch
      %104 = sbr.rel (0) target = $region45
    $region44: #{dqn_forward.1} parent=1 // pred_region
      %106 = dma.done [#allocation6], 512
    $region45: #{dqn_forward.1} parent=1 // pred_fallthru
      _
    // Predicated region
    $region46: #{dqn_forward.1} parent=1 // pred_check
      _
    $region47: #{dqn_forward.1} parent=1 // pred_check_branch
      %108 = sbr.rel (0) target = $region49
    $region48: #{dqn_forward.1} parent=1 // pred_region
      %110 = dma.done [#allocation6], 32
    $region49: #{dqn_forward.1} parent=1 // pred_fallthru
      _
    // Predicated region
    $region50: #{dqn_forward.1} parent=1 // pred_check
      _
    $region51: #{dqn_forward.1} parent=1 // pred_check_branch
      %112 = sbr.rel (0) target = $region53
    $region52: #{dqn_forward.1} parent=1 // pred_region
      %114 = dma.done [#allocation9], 4096
    $region53: #{dqn_forward.1} parent=1 // pred_fallthru
      _
    // Predicated region
    $region54: #{dqn_forward.1} parent=1 // pred_check
      _
    $region55: #{dqn_forward.1} parent=1 // pred_check_branch
      %116 = sbr.rel (0) target = $region57
    $region56: #{dqn_forward.1} parent=1 // pred_region
      %118 = dma.done [#allocation9], 4096
    $region57: #{dqn_forward.1} parent=1 // pred_fallthru
      _
    // Predicated region
    $region58: #{dqn_forward.1} parent=1 // pred_check
      _
    $region59: #{dqn_forward.1} parent=1 // pred_check_branch
      %120 = sbr.rel (0) target = $region61
    $region60: #{dqn_forward.1} parent=1 // pred_region
      %122 = dma.done [#allocation12], 2048
    $region61: #{dqn_forward.1} parent=1 // pred_fallthru
      _
    %v124 = vld [vmem:[#allocation2] sm:$0xff]
    %v125 = vpack.c.bf16 %v124, %v124
    %v126 = vld [vmem:[#allocation5] sm:$0xff]
    %v127 = vld [vmem:[#allocation5 + $0x8] sm:$0xff]
    %v128 = vld [vmem:[#allocation5 + $0x10] sm:$0xff]
    %v129 = vld [vmem:[#allocation5 + $0x18] sm:$0xff]
    %v130 = vld [vmem:[#allocation7] sm:$0x3]
    %v132 = vperm.slane %v130, 0
    %v133 = vperm.slane %v130, 1
    %v140 = vunpack.c.l.b16 %v126
    %v141 = vunpack.c.h.b16 %v126
    %v142 = vunpack.c.l.b16 %v127
    %v143 = vunpack.c.h.b16 %v127
    %v144 = vunpack.c.l.b16 %v128
    %v145 = vunpack.c.h.b16 %v128
    %v146 = vunpack.c.l.b16 %v129
    %v147 = vunpack.c.h.b16 %v129
    %v148 = vpack.c.b16 %v142, %v140
    %v149 = vpack.c.b16 %v143, %v141
    %v150 = vpack.c.b16 %v146, %v144
    %v151 = vpack.c.b16 %v147, %v145
    %vm156 = vcmask 261120
    %v158 = vsel %vm156, %v125, 0
    %160 = vmatpush.bf16.msra.mxu0 0
    %161 = vmatpush.bf16.msra.mxu0 0
    %162 = vmatpush.bf16.msra.mxu0 0
    %163 = vmatpush.bf16.msra.mxu0 0
    %164 = vmatpush.bf16.msra.mxu0 0
    %165 = vmatpush.bf16.msra.mxu0 0
    %166 = vmatpush.bf16.msra.mxu0 %v150
    %167 = vmatpush.bf16.msra.mxu0 %v148
    %168 = vmatmul.bf16.gmra.mxu0 %v158
    %v169 = vpop.f32.mrf.mxu0
    %v170 = vadd.f32 %v132, %v169
    %v171 = vpop.f32.mrf.mxu0
    %172 = vdwg.mxu0
    %173 = vmatpush.bf16.msra.mxu0 0
    %174 = vmatpush.bf16.msra.mxu0 0
    %175 = vmatpush.bf16.msra.mxu0 0
    %176 = vmatpush.bf16.msra.mxu0 0
    %177 = vmatpush.bf16.msra.mxu0 0
    %178 = vmatpush.bf16.msra.mxu0 0
    %179 = vmatpush.bf16.msra.mxu0 %v151
    %180 = vmatpush.bf16.msra.mxu0 %v149
    %181 = vmatmul.bf16.gmra.mxu0 %v158
    %v182 = vpop.f32.mrf.mxu0
    %v183 = vadd.f32 %v133, %v182
    %v184 = vpop.f32.mrf.mxu0
    %185 = vdwg.mxu0
    %v186 = vmax.f32 %v170, 0.0
    %v187 = vmax.f32 %v183, 0.0
    %v188 = vpack.c.bf16 %v186, %v186
    %v189 = vpack.c.bf16 %v187, %v187
    %v190 = vld [vmem:[#allocation8] sm:$0xff]
    %v191 = vld [vmem:[#allocation8 + $0x8] sm:$0xff]
    %v192 = vld [vmem:[#allocation8 + $0x10] sm:$0xff]
    %v193 = vld [vmem:[#allocation8 + $0x18] sm:$0xff]
    %v194 = vld [vmem:[#allocation8 + $0x20] sm:$0xff]
    %v195 = vld [vmem:[#allocation8 + $0x28] sm:$0xff]
    %v196 = vld [vmem:[#allocation8 + $0x30] sm:$0xff]
    %v197 = vld [vmem:[#allocation8 + $0x38] sm:$0xff]
    %v198 = vld [vmem:[#allocation8 + $0x40] sm:$0xff]
    %v199 = vld [vmem:[#allocation8 + $0x48] sm:$0xff]
    %v200 = vld [vmem:[#allocation8 + $0x50] sm:$0xff]
    %v201 = vld [vmem:[#allocation8 + $0x58] sm:$0xff]
    %v202 = vld [vmem:[#allocation8 + $0x60] sm:$0xff]
    %v203 = vld [vmem:[#allocation8 + $0x68] sm:$0xff]
    %v204 = vld [vmem:[#allocation8 + $0x70] sm:$0xff]
    %v205 = vld [vmem:[#allocation8 + $0x78] sm:$0xff]
    %v206 = vld [vmem:[#allocation8 + $0x80] sm:$0xff]
    %v207 = vld [vmem:[#allocation8 + $0x88] sm:$0xff]
    %v208 = vld [vmem:[#allocation8 + $0x90] sm:$0xff]
    %v209 = vld [vmem:[#allocation8 + $0x98] sm:$0xff]
    %v210 = vld [vmem:[#allocation8 + $0xa0] sm:$0xff]
    %v211 = vld [vmem:[#allocation8 + $0xa8] sm:$0xff]
    %v212 = vld [vmem:[#allocation8 + $0xb0] sm:$0xff]
    %v213 = vld [vmem:[#allocation8 + $0xb8] sm:$0xff]
    %v214 = vld [vmem:[#allocation8 + $0xc0] sm:$0xff]
    %v215 = vld [vmem:[#allocation8 + $0xc8] sm:$0xff]
    %v216 = vld [vmem:[#allocation8 + $0xd0] sm:$0xff]
    %v217 = vld [vmem:[#allocation8 + $0xd8] sm:$0xff]
    %v218 = vld [vmem:[#allocation8 + $0xe0] sm:$0xff]
    %v219 = vld [vmem:[#allocation8 + $0xe8] sm:$0xff]
    %v220 = vld [vmem:[#allocation8 + $0xf0] sm:$0xff]
    %v221 = vld [vmem:[#allocation8 + $0xf8] sm:$0xff]
    %v222 = vld [vmem:[%s4] sm:$0x3]
    %v224 = vperm.slane %v222, 0
    %v225 = vperm.slane %v222, 1
    %v260 = vunpack.c.l.b16 %v190
    %v261 = vunpack.c.h.b16 %v190
    %v262 = vunpack.c.l.b16 %v191
    %v263 = vunpack.c.h.b16 %v191
    %v264 = vunpack.c.l.b16 %v192
    %v265 = vunpack.c.h.b16 %v192
    %v266 = vunpack.c.l.b16 %v193
    %v267 = vunpack.c.h.b16 %v193
    %v268 = vunpack.c.l.b16 %v194
    %v269 = vunpack.c.h.b16 %v194
    %v270 = vunpack.c.l.b16 %v195
    %v271 = vunpack.c.h.b16 %v195
    %v272 = vunpack.c.l.b16 %v196
    %v273 = vunpack.c.h.b16 %v196
    %v274 = vunpack.c.l.b16 %v197
    %v275 = vunpack.c.h.b16 %v197
    %v276 = vunpack.c.l.b16 %v198
    %v277 = vunpack.c.h.b16 %v198
    %v278 = vunpack.c.l.b16 %v199
    %v279 = vunpack.c.h.b16 %v199
    %v280 = vunpack.c.l.b16 %v200
    %v281 = vunpack.c.h.b16 %v200
    %v282 = vunpack.c.l.b16 %v201
    %v283 = vunpack.c.h.b16 %v201
    %v284 = vunpack.c.l.b16 %v202
    %v285 = vunpack.c.h.b16 %v202
    %v286 = vunpack.c.l.b16 %v203
    %v287 = vunpack.c.h.b16 %v203
    %v288 = vunpack.c.l.b16 %v204
    %v289 = vunpack.c.h.b16 %v204
    %v290 = vunpack.c.l.b16 %v205
    %v291 = vunpack.c.h.b16 %v205
    %v292 = vunpack.c.l.b16 %v206
    %v293 = vunpack.c.h.b16 %v206
    %v294 = vunpack.c.l.b16 %v207
    %v295 = vunpack.c.h.b16 %v207
    %v296 = vunpack.c.l.b16 %v208
    %v297 = vunpack.c.h.b16 %v208
    %v298 = vunpack.c.l.b16 %v209
    %v299 = vunpack.c.h.b16 %v209
    %v300 = vunpack.c.l.b16 %v210
    %v301 = vunpack.c.h.b16 %v210
    %v302 = vunpack.c.l.b16 %v211
    %v303 = vunpack.c.h.b16 %v211
    %v304 = vunpack.c.l.b16 %v212
    %v305 = vunpack.c.h.b16 %v212
    %v306 = vunpack.c.l.b16 %v213
    %v307 = vunpack.c.h.b16 %v213
    %v308 = vunpack.c.l.b16 %v214
    %v309 = vunpack.c.h.b16 %v214
    %v310 = vunpack.c.l.b16 %v215
    %v311 = vunpack.c.h.b16 %v215
    %v312 = vunpack.c.l.b16 %v216
    %v313 = vunpack.c.h.b16 %v216
    %v314 = vunpack.c.l.b16 %v217
    %v315 = vunpack.c.h.b16 %v217
    %v316 = vunpack.c.l.b16 %v218
    %v317 = vunpack.c.h.b16 %v218
    %v318 = vunpack.c.l.b16 %v219
    %v319 = vunpack.c.h.b16 %v219
    %v320 = vunpack.c.l.b16 %v220
    %v321 = vunpack.c.h.b16 %v220
    %v322 = vunpack.c.l.b16 %v221
    %v323 = vunpack.c.h.b16 %v221
    %v324 = vpack.c.b16 %v262, %v260
    %v325 = vpack.c.b16 %v263, %v261
    %v326 = vpack.c.b16 %v266, %v264
    %v327 = vpack.c.b16 %v267, %v265
    %v328 = vpack.c.b16 %v270, %v268
    %v329 = vpack.c.b16 %v271, %v269
    %v330 = vpack.c.b16 %v274, %v272
    %v331 = vpack.c.b16 %v275, %v273
    %v332 = vpack.c.b16 %v278, %v276
    %v333 = vpack.c.b16 %v279, %v277
    %v334 = vpack.c.b16 %v282, %v280
    %v335 = vpack.c.b16 %v283, %v281
    %v336 = vpack.c.b16 %v286, %v284
    %v337 = vpack.c.b16 %v287, %v285
    %v338 = vpack.c.b16 %v290, %v288
    %v339 = vpack.c.b16 %v291, %v289
    %v340 = vpack.c.b16 %v294, %v292
    %v341 = vpack.c.b16 %v295, %v293
    %v342 = vpack.c.b16 %v298, %v296
    %v343 = vpack.c.b16 %v299, %v297
    %v344 = vpack.c.b16 %v302, %v300
    %v345 = vpack.c.b16 %v303, %v301
    %v346 = vpack.c.b16 %v306, %v304
    %v347 = vpack.c.b16 %v307, %v305
    %v348 = vpack.c.b16 %v310, %v308
    %v349 = vpack.c.b16 %v311, %v309
    %v350 = vpack.c.b16 %v314, %v312
    %v351 = vpack.c.b16 %v315, %v313
    %v352 = vpack.c.b16 %v318, %v316
    %v353 = vpack.c.b16 %v319, %v317
    %v354 = vpack.c.b16 %v322, %v320
    %v355 = vpack.c.b16 %v323, %v321
    %388 = vmatpush.bf16.msra.mxu0 %v338
    %389 = vmatpush.bf16.msra.mxu0 %v336
    %390 = vmatpush.bf16.msra.mxu0 %v334
    %391 = vmatpush.bf16.msra.mxu0 %v332
    %392 = vmatpush.bf16.msra.mxu0 %v330
    %393 = vmatpush.bf16.msra.mxu0 %v328
    %394 = vmatpush.bf16.msra.mxu0 %v326
    %395 = vmatpush.bf16.msra.mxu0 %v324
    %396 = vmatmul.bf16.gmra.mxu0 %v188
    %v397 = vpop.f32.mrf.mxu0
    %v398 = vadd.f32 %v224, %v397
    %v399 = vpop.f32.mrf.mxu0
    %400 = vdwg.mxu0
    %401 = vmatpush.bf16.msra.mxu0 %v354
    %402 = vmatpush.bf16.msra.mxu0 %v352
    %403 = vmatpush.bf16.msra.mxu0 %v350
    %404 = vmatpush.bf16.msra.mxu0 %v348
    %405 = vmatpush.bf16.msra.mxu0 %v346
    %406 = vmatpush.bf16.msra.mxu0 %v344
    %407 = vmatpush.bf16.msra.mxu0 %v342
    %408 = vmatpush.bf16.msra.mxu0 %v340
    %409 = vmatmul.bf16.gmra.mxu0 %v189
    %v410 = vpop.f32.mrf.mxu0
    %v411 = vadd.f32 %v398, %v410
    %v412 = vpop.f32.mrf.mxu0
    %413 = vdwg.mxu0
    %414 = vmatpush.bf16.msra.mxu0 %v339
    %415 = vmatpush.bf16.msra.mxu0 %v337
    %416 = vmatpush.bf16.msra.mxu0 %v335
    %417 = vmatpush.bf16.msra.mxu0 %v333
    %418 = vmatpush.bf16.msra.mxu0 %v331
    %419 = vmatpush.bf16.msra.mxu0 %v329
    %420 = vmatpush.bf16.msra.mxu0 %v327
    %421 = vmatpush.bf16.msra.mxu0 %v325
    %422 = vmatmul.bf16.gmra.mxu0 %v188
    %v423 = vpop.f32.mrf.mxu0
    %v424 = vadd.f32 %v225, %v423
    %v425 = vpop.f32.mrf.mxu0
    %426 = vdwg.mxu0
    %427 = vmatpush.bf16.msra.mxu0 %v355
    %428 = vmatpush.bf16.msra.mxu0 %v353
    %429 = vmatpush.bf16.msra.mxu0 %v351
    %430 = vmatpush.bf16.msra.mxu0 %v349
    %431 = vmatpush.bf16.msra.mxu0 %v347
    %432 = vmatpush.bf16.msra.mxu0 %v345
    %433 = vmatpush.bf16.msra.mxu0 %v343
    %434 = vmatpush.bf16.msra.mxu0 %v341
    %435 = vmatmul.bf16.gmra.mxu0 %v189
    %v436 = vpop.f32.mrf.mxu0
    %v437 = vadd.f32 %v424, %v436
    %v438 = vpop.f32.mrf.mxu0
    %439 = vdwg.mxu0
    %v440 = vmax.f32 %v411, 0.0
    %v441 = vmax.f32 %v437, 0.0
    %v442 = vpack.c.bf16 %v440, %v440
    %v443 = vpack.c.bf16 %v441, %v441
    %v444 = vld [vmem:[#allocation10] sm:$0xff]
    %v445 = vld [vmem:[#allocation10 + $0x8] sm:$0xff]
    %v446 = vld [vmem:[#allocation10 + $0x10] sm:$0xff]
    %v447 = vld [vmem:[#allocation10 + $0x18] sm:$0xff]
    %v448 = vld [vmem:[#allocation10 + $0x20] sm:$0xff]
    %v449 = vld [vmem:[#allocation10 + $0x28] sm:$0xff]
    %v450 = vld [vmem:[#allocation10 + $0x30] sm:$0xff]
    %v451 = vld [vmem:[#allocation10 + $0x38] sm:$0xff]
    %v452 = vld [vmem:[#allocation10 + $0x40] sm:$0xff]
    %v453 = vld [vmem:[#allocation10 + $0x48] sm:$0xff]
    %v454 = vld [vmem:[#allocation10 + $0x50] sm:$0xff]
    %v455 = vld [vmem:[#allocation10 + $0x58] sm:$0xff]
    %v456 = vld [vmem:[#allocation10 + $0x60] sm:$0xff]
    %v457 = vld [vmem:[#allocation10 + $0x68] sm:$0xff]
    %v458 = vld [vmem:[#allocation10 + $0x70] sm:$0xff]
    %v459 = vld [vmem:[#allocation10 + $0x78] sm:$0xff]
    %v460 = vld [vmem:[#allocation10 + $0x80] sm:$0xff]
    %v461 = vld [vmem:[#allocation10 + $0x88] sm:$0xff]
    %v462 = vld [vmem:[#allocation10 + $0x90] sm:$0xff]
    %v463 = vld [vmem:[#allocation10 + $0x98] sm:$0xff]
    %v464 = vld [vmem:[#allocation10 + $0xa0] sm:$0xff]
    %v465 = vld [vmem:[#allocation10 + $0xa8] sm:$0xff]
    %v466 = vld [vmem:[#allocation10 + $0xb0] sm:$0xff]
    %v467 = vld [vmem:[#allocation10 + $0xb8] sm:$0xff]
    %v468 = vld [vmem:[#allocation10 + $0xc0] sm:$0xff]
    %v469 = vld [vmem:[#allocation10 + $0xc8] sm:$0xff]
    %v470 = vld [vmem:[#allocation10 + $0xd0] sm:$0xff]
    %v471 = vld [vmem:[#allocation10 + $0xd8] sm:$0xff]
    %v472 = vld [vmem:[#allocation10 + $0xe0] sm:$0xff]
    %v473 = vld [vmem:[#allocation10 + $0xe8] sm:$0xff]
    %v474 = vld [vmem:[#allocation10 + $0xf0] sm:$0xff]
    %v475 = vld [vmem:[#allocation10 + $0xf8] sm:$0xff]
    %v476 = vld [vmem:[%s6] sm:$0x3]
    %v478 = vperm.slane %v476, 0
    %v479 = vperm.slane %v476, 1
    %v514 = vunpack.c.l.b16 %v444
    %v515 = vunpack.c.h.b16 %v444
    %v516 = vunpack.c.l.b16 %v445
    %v517 = vunpack.c.h.b16 %v445
    %v518 = vunpack.c.l.b16 %v446
    %v519 = vunpack.c.h.b16 %v446
    %v520 = vunpack.c.l.b16 %v447
    %v521 = vunpack.c.h.b16 %v447
    %v522 = vunpack.c.l.b16 %v448
    %v523 = vunpack.c.h.b16 %v448
    %v524 = vunpack.c.l.b16 %v449
    %v525 = vunpack.c.h.b16 %v449
    %v526 = vunpack.c.l.b16 %v450
    %v527 = vunpack.c.h.b16 %v450
    %v528 = vunpack.c.l.b16 %v451
    %v529 = vunpack.c.h.b16 %v451
    %v530 = vunpack.c.l.b16 %v452
    %v531 = vunpack.c.h.b16 %v452
    %v532 = vunpack.c.l.b16 %v453
    %v533 = vunpack.c.h.b16 %v453
    %v534 = vunpack.c.l.b16 %v454
    %v535 = vunpack.c.h.b16 %v454
    %v536 = vunpack.c.l.b16 %v455
    %v537 = vunpack.c.h.b16 %v455
    %v538 = vunpack.c.l.b16 %v456
    %v539 = vunpack.c.h.b16 %v456
    %v540 = vunpack.c.l.b16 %v457
    %v541 = vunpack.c.h.b16 %v457
    %v542 = vunpack.c.l.b16 %v458
    %v543 = vunpack.c.h.b16 %v458
    %v544 = vunpack.c.l.b16 %v459
    %v545 = vunpack.c.h.b16 %v459
    %v546 = vunpack.c.l.b16 %v460
    %v547 = vunpack.c.h.b16 %v460
    %v548 = vunpack.c.l.b16 %v461
    %v549 = vunpack.c.h.b16 %v461
    %v550 = vunpack.c.l.b16 %v462
    %v551 = vunpack.c.h.b16 %v462
    %v552 = vunpack.c.l.b16 %v463
    %v553 = vunpack.c.h.b16 %v463
    %v554 = vunpack.c.l.b16 %v464
    %v555 = vunpack.c.h.b16 %v464
    %v556 = vunpack.c.l.b16 %v465
    %v557 = vunpack.c.h.b16 %v465
    %v558 = vunpack.c.l.b16 %v466
    %v559 = vunpack.c.h.b16 %v466
    %v560 = vunpack.c.l.b16 %v467
    %v561 = vunpack.c.h.b16 %v467
    %v562 = vunpack.c.l.b16 %v468
    %v563 = vunpack.c.h.b16 %v468
    %v564 = vunpack.c.l.b16 %v469
    %v565 = vunpack.c.h.b16 %v469
    %v566 = vunpack.c.l.b16 %v470
    %v567 = vunpack.c.h.b16 %v470
    %v568 = vunpack.c.l.b16 %v471
    %v569 = vunpack.c.h.b16 %v471
    %v570 = vunpack.c.l.b16 %v472
    %v571 = vunpack.c.h.b16 %v472
    %v572 = vunpack.c.l.b16 %v473
    %v573 = vunpack.c.h.b16 %v473
    %v574 = vunpack.c.l.b16 %v474
    %v575 = vunpack.c.h.b16 %v474
    %v576 = vunpack.c.l.b16 %v475
    %v577 = vunpack.c.h.b16 %v475
    %v578 = vpack.c.b16 %v516, %v514
    %v579 = vpack.c.b16 %v517, %v515
    %v580 = vpack.c.b16 %v520, %v518
    %v581 = vpack.c.b16 %v521, %v519
    %v582 = vpack.c.b16 %v524, %v522
    %v583 = vpack.c.b16 %v525, %v523
    %v584 = vpack.c.b16 %v528, %v526
    %v585 = vpack.c.b16 %v529, %v527
    %v586 = vpack.c.b16 %v532, %v530
    %v587 = vpack.c.b16 %v533, %v531
    %v588 = vpack.c.b16 %v536, %v534
    %v589 = vpack.c.b16 %v537, %v535
    %v590 = vpack.c.b16 %v540, %v538
    %v591 = vpack.c.b16 %v541, %v539
    %v592 = vpack.c.b16 %v544, %v542
    %v593 = vpack.c.b16 %v545, %v543
    %v594 = vpack.c.b16 %v548, %v546
    %v595 = vpack.c.b16 %v549, %v547
    %v596 = vpack.c.b16 %v552, %v550
    %v597 = vpack.c.b16 %v553, %v551
    %v598 = vpack.c.b16 %v556, %v554
    %v599 = vpack.c.b16 %v557, %v555
    %v600 = vpack.c.b16 %v560, %v558
    %v601 = vpack.c.b16 %v561, %v559
    %v602 = vpack.c.b16 %v564, %v562
    %v603 = vpack.c.b16 %v565, %v563
    %v604 = vpack.c.b16 %v568, %v566
    %v605 = vpack.c.b16 %v569, %v567
    %v606 = vpack.c.b16 %v572, %v570
    %v607 = vpack.c.b16 %v573, %v571
    %v608 = vpack.c.b16 %v576, %v574
    %v609 = vpack.c.b16 %v577, %v575
    %642 = vmatpush.bf16.msra.mxu0 %v592
    %643 = vmatpush.bf16.msra.mxu0 %v590
    %644 = vmatpush.bf16.msra.mxu0 %v588
    %645 = vmatpush.bf16.msra.mxu0 %v586
    %646 = vmatpush.bf16.msra.mxu0 %v584
    %647 = vmatpush.bf16.msra.mxu0 %v582
    %648 = vmatpush.bf16.msra.mxu0 %v580
    %649 = vmatpush.bf16.msra.mxu0 %v578
    %650 = vmatmul.bf16.gmra.mxu0 %v442
    %v651 = vpop.f32.mrf.mxu0
    %v652 = vadd.f32 %v478, %v651
    %v653 = vpop.f32.mrf.mxu0
    %654 = vdwg.mxu0
    %655 = vmatpush.bf16.msra.mxu0 %v608
    %656 = vmatpush.bf16.msra.mxu0 %v606
    %657 = vmatpush.bf16.msra.mxu0 %v604
    %658 = vmatpush.bf16.msra.mxu0 %v602
    %659 = vmatpush.bf16.msra.mxu0 %v600
    %660 = vmatpush.bf16.msra.mxu0 %v598
    %661 = vmatpush.bf16.msra.mxu0 %v596
    %662 = vmatpush.bf16.msra.mxu0 %v594
    %663 = vmatmul.bf16.gmra.mxu0 %v443
    %v664 = vpop.f32.mrf.mxu0
    %v665 = vadd.f32 %v652, %v664
    %v666 = vpop.f32.mrf.mxu0
    %667 = vdwg.mxu0
    %668 = vmatpush.bf16.msra.mxu0 %v593
    %669 = vmatpush.bf16.msra.mxu0 %v591
    %670 = vmatpush.bf16.msra.mxu0 %v589
    %671 = vmatpush.bf16.msra.mxu0 %v587
    %672 = vmatpush.bf16.msra.mxu0 %v585
    %673 = vmatpush.bf16.msra.mxu0 %v583
    %674 = vmatpush.bf16.msra.mxu0 %v581
    %675 = vmatpush.bf16.msra.mxu0 %v579
    %676 = vmatmul.bf16.gmra.mxu0 %v442
    %v677 = vpop.f32.mrf.mxu0
    %v678 = vadd.f32 %v479, %v677
    %v679 = vpop.f32.mrf.mxu0
    %680 = vdwg.mxu0
    %681 = vmatpush.bf16.msra.mxu0 %v609
    %682 = vmatpush.bf16.msra.mxu0 %v607
    %683 = vmatpush.bf16.msra.mxu0 %v605
    %684 = vmatpush.bf16.msra.mxu0 %v603
    %685 = vmatpush.bf16.msra.mxu0 %v601
    %686 = vmatpush.bf16.msra.mxu0 %v599
    %687 = vmatpush.bf16.msra.mxu0 %v597
    %688 = vmatpush.bf16.msra.mxu0 %v595
    %689 = vmatmul.bf16.gmra.mxu0 %v443
    %v690 = vpop.f32.mrf.mxu0
    %v691 = vadd.f32 %v678, %v690
    %v692 = vpop.f32.mrf.mxu0
    %693 = vdwg.mxu0
    %v694 = vmax.f32 %v665, 0.0
    %v695 = vmax.f32 %v691, 0.0
    %v696 = vpack.c.bf16 %v694, %v694
    %v697 = vpack.c.bf16 %v695, %v695
    %v698 = vld [vmem:[#allocation11] sm:$0xf]
    %v699 = vld [vmem:[#allocation11 + $0x4] sm:$0xf]
    %v700 = vld [vmem:[#allocation11 + $0x8] sm:$0xf]
    %v701 = vld [vmem:[#allocation11 + $0xc] sm:$0xf]
    %v702 = vld [vmem:[#allocation11 + $0x10] sm:$0xf]
    %v703 = vld [vmem:[#allocation11 + $0x14] sm:$0xf]
    %v704 = vld [vmem:[#allocation11 + $0x18] sm:$0xf]
    %v705 = vld [vmem:[#allocation11 + $0x1c] sm:$0xf]
    %v706 = vld [vmem:[#allocation11 + $0x20] sm:$0xf]
    %v707 = vld [vmem:[#allocation11 + $0x24] sm:$0xf]
    %v708 = vld [vmem:[#allocation11 + $0x28] sm:$0xf]
    %v709 = vld [vmem:[#allocation11 + $0x2c] sm:$0xf]
    %v710 = vld [vmem:[#allocation11 + $0x30] sm:$0xf]
    %v711 = vld [vmem:[#allocation11 + $0x34] sm:$0xf]
    %v712 = vld [vmem:[#allocation11 + $0x38] sm:$0xf]
    %v713 = vld [vmem:[#allocation11 + $0x3c] sm:$0xf]
    %v714 = vld [vmem:[#allocation11 + $0x40] sm:$0xf]
    %v715 = vld [vmem:[#allocation11 + $0x44] sm:$0xf]
    %v716 = vld [vmem:[#allocation11 + $0x48] sm:$0xf]
    %v717 = vld [vmem:[#allocation11 + $0x4c] sm:$0xf]
    %v718 = vld [vmem:[#allocation11 + $0x50] sm:$0xf]
    %v719 = vld [vmem:[#allocation11 + $0x54] sm:$0xf]
    %v720 = vld [vmem:[#allocation11 + $0x58] sm:$0xf]
    %v721 = vld [vmem:[#allocation11 + $0x5c] sm:$0xf]
    %v722 = vld [vmem:[#allocation11 + $0x60] sm:$0xf]
    %v723 = vld [vmem:[#allocation11 + $0x64] sm:$0xf]
    %v724 = vld [vmem:[#allocation11 + $0x68] sm:$0xf]
    %v725 = vld [vmem:[#allocation11 + $0x6c] sm:$0xf]
    %v726 = vld [vmem:[#allocation11 + $0x70] sm:$0xf]
    %v727 = vld [vmem:[#allocation11 + $0x74] sm:$0xf]
    %v728 = vld [vmem:[#allocation11 + $0x78] sm:$0xf]
    %v729 = vld [vmem:[#allocation11 + $0x7c] sm:$0xf]
    %v730 = vld [vmem:[%s8] sm:$0x1]
    %v732 = vperm.slane %v730, 0
    %v766 = vunpack.c.l.b16 %v698
    %v767 = vunpack.c.l.b16 %v699
    %v768 = vunpack.c.l.b16 %v700
    %v769 = vunpack.c.l.b16 %v701
    %v770 = vunpack.c.l.b16 %v702
    %v771 = vunpack.c.l.b16 %v703
    %v772 = vunpack.c.l.b16 %v704
    %v773 = vunpack.c.l.b16 %v705
    %v774 = vunpack.c.l.b16 %v706
    %v775 = vunpack.c.l.b16 %v707
    %v776 = vunpack.c.l.b16 %v708
    %v777 = vunpack.c.l.b16 %v709
    %v778 = vunpack.c.l.b16 %v710
    %v779 = vunpack.c.l.b16 %v711
    %v780 = vunpack.c.l.b16 %v712
    %v781 = vunpack.c.l.b16 %v713
    %v782 = vunpack.c.l.b16 %v714
    %v783 = vunpack.c.l.b16 %v715
    %v784 = vunpack.c.l.b16 %v716
    %v785 = vunpack.c.l.b16 %v717
    %v786 = vunpack.c.l.b16 %v718
    %v787 = vunpack.c.l.b16 %v719
    %v788 = vunpack.c.l.b16 %v720
    %v789 = vunpack.c.l.b16 %v721
    %v790 = vunpack.c.l.b16 %v722
    %v791 = vunpack.c.l.b16 %v723
    %v792 = vunpack.c.l.b16 %v724
    %v793 = vunpack.c.l.b16 %v725
    %v794 = vunpack.c.l.b16 %v726
    %v795 = vunpack.c.l.b16 %v727
    %v796 = vunpack.c.l.b16 %v728
    %v797 = vunpack.c.l.b16 %v729
    %v798 = vpack.c.b16 %v767, %v766
    %v799 = vpack.c.b16 %v769, %v768
    %v800 = vpack.c.b16 %v771, %v770
    %v801 = vpack.c.b16 %v773, %v772
    %v802 = vpack.c.b16 %v775, %v774
    %v803 = vpack.c.b16 %v777, %v776
    %v804 = vpack.c.b16 %v779, %v778
    %v805 = vpack.c.b16 %v781, %v780
    %v806 = vpack.c.b16 %v783, %v782
    %v807 = vpack.c.b16 %v785, %v784
    %v808 = vpack.c.b16 %v787, %v786
    %v809 = vpack.c.b16 %v789, %v788
    %v810 = vpack.c.b16 %v791, %v790
    %v811 = vpack.c.b16 %v793, %v792
    %v812 = vpack.c.b16 %v795, %v794
    %v813 = vpack.c.b16 %v797, %v796
    %830 = vmatpush.bf16.msra.mxu0 %v805
    %831 = vmatpush.bf16.msra.mxu0 %v804
    %832 = vmatpush.bf16.msra.mxu0 %v803
    %833 = vmatpush.bf16.msra.mxu0 %v802
    %834 = vmatpush.bf16.msra.mxu0 %v801
    %835 = vmatpush.bf16.msra.mxu0 %v800
    %836 = vmatpush.bf16.msra.mxu0 %v799
    %837 = vmatpush.bf16.msra.mxu0 %v798
    %838 = vmatmul.bf16.gmra.mxu0 %v696
    %v839 = vpop.f32.mrf.mxu0
    %v840 = vadd.f32 %v732, %v839
    %v841 = vpop.f32.mrf.mxu0
    %842 = vdwg.mxu0
    %843 = vmatpush.bf16.msra.mxu0 %v813
    %844 = vmatpush.bf16.msra.mxu0 %v812
    %845 = vmatpush.bf16.msra.mxu0 %v811
    %846 = vmatpush.bf16.msra.mxu0 %v810
    %847 = vmatpush.bf16.msra.mxu0 %v809
    %848 = vmatpush.bf16.msra.mxu0 %v808
    %849 = vmatpush.bf16.msra.mxu0 %v807
    %850 = vmatpush.bf16.msra.mxu0 %v806
    %851 = vmatmul.bf16.gmra.mxu0 %v697
    %v852 = vpop.f32.mrf.mxu0
    %v853 = vadd.f32 %v840, %v852
    %v854 = vpop.f32.mrf.mxu0
    %855 = vdwg.mxu0
    %v856 = vpack.c.bf16 %v853, %v853
    %857 = vst [vmem:[#allocation13] sm:$0xf] %v856
    // Predicated region
    $region62: #{dqn_forward.1} parent=1 // pred_check
      _
    $region63: #{dqn_forward.1} parent=1 // pred_check_branch
      %859 = sbr.rel (0) target = $region65
    $region64: #{dqn_forward.1} parent=1 // pred_region
      %861 = vsyncadd [#allocation4], 0
      %s863 = sshll.u32 [#allocation13], 4
      %s864 = int_to_ptr.vmem [resolvable:$true] %s863
      %s865 = sshll.u32 %s9, 4
      %s866 = int_to_ptr.hbm [resolvable:$true] %s865
      %868 = dma.vmem_to_hbm [thread:$0]  %s864, 64, %s866, [#allocation4]
    $region65: #{dqn_forward.1} parent=1 // pred_fallthru
      _
    // Predicated region
    $region66: #{dqn_forward.1} parent=1 // pred_check
      _
    $region67: #{dqn_forward.1} parent=1 // pred_check_branch
      %870 = sbr.rel (0) target = $region69
    $region68: #{dqn_forward.1} parent=1 // pred_region
      %872 = dma.done [#allocation4], 64
    $region69: #{dqn_forward.1} parent=1 // pred_fallthru
      _
    %873 = vsyncpa [#allocation3], 1
    %874 = vsyncpa [#allocation6], 1
    %875 = vsyncpa [#allocation9], 1
    %876 = vsyncpa [#allocation12], 1
    %877 = vsyncpa [#allocation4], 1

</llo_original>
